<compile_context>
chip_gen: v5e
topology: v5e:2x2
jax: 0.10.0
libtpu: 0.0.40
codegen_flags: <defaults>
</compile_context>

<pallas_src>
import jax
import jax.numpy as jnp
from jax.experimental import pallas as pl
from jax.experimental.pallas import tpu as pltpu

_LANE = 128
_TARGET_BLOCK_BYTES = 2 << 20  # ~2 MiB of the I/O dtype per block


def _mish_kernel(x_ref, o_ref):
    # Loads/stores stay in the input dtype; math in f32 (v5e has no bf16
    # VPU/EUP, and f32 keeps full relative precision everywhere).
    x = x_ref[...].astype(jnp.float32)
    # Clamp the exp argument so t^2 never overflows f32; for x >= 20 the ratio
    # num/(num+2) rounds to 1.0 exactly, i.e. mish(x) == x (correct to f32).
    t = jnp.exp(jnp.minimum(x, 20.0))          # single EUP push
    num = t * (t + 2.0)                        # VPU
    y = x * (num / (num + 2.0))                # multiplicative form: no x - ~x
    o_ref[...] = y.astype(o_ref.dtype)


def _mish_jnp(x):
    # Same math as the kernel, for the (<128 element) ragged tail / tiny inputs.
    xf = x.astype(jnp.float32)
    t = jnp.exp(jnp.minimum(xf, 20.0))
    num = t * (t + 2.0)
    return (xf * (num / (num + 2.0))).astype(x.dtype)


def _round_up(v, m):
    return -(-v // m) * m


def mish(x: jax.Array) -> jax.Array:
    """Elementwise Mish via a Pallas TPU kernel. Works for any shape/dtype."""
    orig_shape = x.shape
    orig_dtype = x.dtype
    n = x.size
    if n == 0:
        return x

    flat = x.reshape(-1)
    rows = n // _LANE
    tail = n - rows * _LANE

    # Tiny input (< one lane row): no kernel launch, just do it in jnp.
    if rows == 0:
        return _mish_jnp(flat).reshape(orig_shape)

    # Lane-aligned prefix goes through the kernel (no pad pass); tail via jnp.
    main = flat[: rows * _LANE] if tail else flat
    x2d = main.reshape(rows, _LANE)

    itemsize = jnp.dtype(orig_dtype).itemsize

    # Dtype-aware max rows per block: keep block bytes ~2 MiB of the I/O dtype.
    rt_cap = max(8, _round_up(_TARGET_BLOCK_BYTES // (_LANE * itemsize), 8))
    # Even number of balanced blocks so the v7x 2-TC split is even (>=2 blocks
    # whenever the input is big enough to split on sublane boundaries).
    if rows > 8:
        num_blocks = 2 * pl.cdiv(rows, 2 * rt_cap)
    else:
        num_blocks = 1
    rt = min(rows, _round_up(pl.cdiv(rows, num_blocks), 8))
    grid = (pl.cdiv(rows, rt),)

    out2d = pl.pallas_call(
        _mish_kernel,
        out_shape=jax.ShapeDtypeStruct((rows, _LANE), orig_dtype),
        grid_spec=pltpu.PrefetchScalarGridSpec(
            num_scalar_prefetch=0,
            grid=grid,
            in_specs=[pl.BlockSpec((rt, _LANE), lambda i: (i, 0))],
            out_specs=pl.BlockSpec((rt, _LANE), lambda i: (i, 0)),
        ),
        compiler_params=pltpu.CompilerParams(
            # Parallel grid axis shards the loop across both TensorCores on v7x.
            dimension_semantics=("parallel",),
        ),
        cost_estimate=pl.CostEstimate(
            flops=8 * rows * _LANE,
            transcendentals=2 * rows * _LANE,   # exp + divide
            bytes_accessed=2 * rows * _LANE * itemsize,
        ),
    )(x2d)

    out = out2d.reshape(-1)
    if tail:
        out = jnp.concatenate([out, _mish_jnp(flat[rows * _LANE:])])
    return out.reshape(orig_shape)


if __name__ == "__main__":
    key = jax.random.PRNGKey(0)
    # Small NCHW-like input consistent with the module's (N, *) contract.
    x = jax.random.normal(key, (2, 4, 16, 16), dtype=jnp.float32) * 3.0

    y = mish(x)
    jax.block_until_ready(y)

    # Reference check against plain-JAX Mish (forward pass of the module).
    y_ref = x * jnp.tanh(jax.nn.softplus(x))
    assert y.shape == x.shape and y.dtype == x.dtype
    assert jnp.max(jnp.abs(y - y_ref)) < 2e-5

    # Also exercise the non-lane-multiple (ragged tail) wrapper path.
    x2 = jax.random.normal(jax.random.PRNGKey(1), (3, 5, 7), dtype=jnp.float32) * 3.0
    y2 = mish(x2)
    jax.block_until_ready(y2)
    y2_ref = x2 * jnp.tanh(jax.nn.softplus(x2))
    assert y2.shape == x2.shape
    assert jnp.max(jnp.abs(y2 - y2_ref)) < 2e-5

    print("KERNEL_OK")
</pallas_src>

<mosaic_0001>
module attributes {stable_mosaic.version = 11 : i64} {
  func.func @_mish_kernel(%arg0: i32, %arg1: memref<8x128xf32, #tpu.memory_space<vmem>>, %arg2: memref<8x128xf32, #tpu.memory_space<vmem>>) attributes {dimension_semantics = [#tpu.dimension_semantics<parallel>], iteration_bounds = array<i64: 2>, scalar_prefetch = 0 : i64, scratch_operands = 0 : i64, tpu.core_type = #tpu.core_type<tc>, window_params = [{transform_indices = @transform_0, window_bounds = array<i64: 8, 128>}, {transform_indices = @transform_1, window_bounds = array<i64: 8, 128>}]} {
    %c0 = arith.constant 0 : index
    %c0_0 = arith.constant 0 : index
    %0 = vector.load %arg1[%c0, %c0_0] : memref<8x128xf32, #tpu.memory_space<vmem>>, vector<8x128xf32>
    %cst = arith.constant 2.000000e+01 : f32
    %1 = vector.broadcast %cst : f32 to vector<8x128xf32>
    %2 = arith.minimumf %0, %1 : vector<8x128xf32>
    %3 = math.exp %2 : vector<8x128xf32>
    %cst_1 = arith.constant 2.000000e+00 : f32
    %4 = vector.broadcast %cst_1 : f32 to vector<8x128xf32>
    %5 = arith.addf %3, %4 : vector<8x128xf32>
    %6 = arith.mulf %3, %5 : vector<8x128xf32>
    %cst_2 = arith.constant 2.000000e+00 : f32
    %7 = vector.broadcast %cst_2 : f32 to vector<8x128xf32>
    %8 = arith.addf %6, %7 : vector<8x128xf32>
    %9 = arith.divf %6, %8 : vector<8x128xf32>
    %10 = arith.mulf %0, %9 : vector<8x128xf32>
    %c0_3 = arith.constant 0 : index
    %c0_4 = arith.constant 0 : index
    %11 = vector.load %arg2[%c0_3, %c0_4] : memref<8x128xf32, #tpu.memory_space<vmem>>, vector<8x128xf32>
    tpu.vector_store %arg2[%c0_3, %c0_4], %10 {strides = array<i32>} : memref<8x128xf32, #tpu.memory_space<vmem>>, vector<8x128xf32>,
    return
  }
  func.func @transform_0(%arg0: i32) -> (i32, i32) {
    %c0_i32 = arith.constant 0 : i32
    %c0_i32_0 = arith.constant 0 : i32
    return %arg0, %c0_i32 : i32, i32
  }
  func.func @transform_1(%arg0: i32) -> (i32, i32) {
    %c0_i32 = arith.constant 0 : i32
    %c0_i32_0 = arith.constant 0 : i32
    return %arg0, %c0_i32 : i32, i32
  }
}

</mosaic_0001>

<llo_original>
// kernel: tpu_custom_call.1
$region0: #{tpu_custom_call.1}
  #allocation0 [shape = 'u32[]', space=smem, size = 0x4, offset = 0x4, fixed_abs, tag = 'smem constant byte address 0x4 - core index']
  #allocation1 [shape = 'u32[72,128]{1,0:T(1,128)}', space=vmem, size = 0x9000, scoped, tag = 'internal scratch']
  %s0 = inlined_call_operand.hbm [shape: f32[16,128], index: 0, kind: input, shape index: {}]
  %s1 = inlined_call_operand.hbm [shape: f32[16,128], index: 1, kind: output, shape index: {}]
  %s2 = sld [smem:[#allocation0]]
  $region41: #{tpu_custom_call.1} parent=0
    _
  %s4 = ssub.s32 1, %s2
  %s5 = scalar_select 0, %s4, %s2
  $region1: #{tpu_custom_call.1} parent=0
    #allocation2 [shape = 'u8[8192]{0}', space=vmem, size = 0x2000, scoped, tag = 'input window, operand 0']
    #allocation3 [shape = 's32[2]{0}', space=sflag, size = 0x8, scoped, tag = 'scoped memory for tpu_custom_call.1']
    #allocation4 [shape = 's32[2]{0}', space=sflag, size = 0x8, scoped, tag = 'scoped memory for tpu_custom_call.1']
    #allocation5 [shape = 'u8[8192]{0}', space=vmem, size = 0x2000, scoped, tag = 'output window, operand 0']
    %6 = vsyncpa [#allocation3], 0
    %s7 = scalar_lea.sflag [#allocation3], 1
    %8 = vsyncpa %s7, 0
    %9 = vsyncpa [#allocation4], 0
    %s10 = scalar_lea.sflag [#allocation4], 1
    %11 = vsyncpa %s10, 0
    loop: start=0, step=1, limit=4
    $region2: #{tpu_custom_call.1} parent=1 // loop_pre_header
      _
    $region3: #{tpu_custom_call.1} parent=1 // loop_header
      %s13 = sphi 0, %s17
      %p14 = scmp.ge.s32.totalorder %s13, 4
      %s23 = sphi 0, %s25
      %s26 = sphi 0, %s23
      %s27 = sphi 0, %s26
      %s43 = sphi 0, %s27
      %s49 = sphi 0, %s51
      %s52 = sphi 0, %s49
      %s53 = sphi 0, %s52
      %s69 = sphi 0, %s53
    $region4: #{tpu_custom_call.1} parent=1 // loop_header_branch
      %16 = sbr.rel (%p14) target = $region8
    $region5: #{tpu_custom_call.1} parent=1 // loop_body
      %s18 = ssub.s32 %s13, 1
      %s19 = ssub.s32 %s13, 2
      %s20 = sadd.s32 %s13, 1
      %s21 = ssub.s32 %s13, %s20
      %p22 = scmp.eq.s32.totalorder %s21, 0
      %s24 = sadd.s32 %s23, 1
      %s25 = scalar_select %p22, %s23, %s24
      %p28 = pneg %p22
      %p29 = scmp.eq.s32.totalorder %s13, 1
      %p30 = por %p28, %p29
      %p31 = scmp.ne.s32.totalorder %s23, %s26
      %p32 = scmp.eq.s32.totalorder %s13, 0
      %p33 = por %p31, %p32
      %p34 = scmp.ne.s32.totalorder %s23, %s26
      %p35 = scmp.eq.s32.totalorder %s18, 1
      %p36 = por %p34, %p35
      %p37 = scmp.ne.s32.totalorder %s26, %s27
      %p38 = scmp.eq.s32.totalorder %s18, 0
      %p39 = por %p37, %p38
      %p40 = scmp.ne.s32.totalorder %s26, %s27
      %p41 = scmp.eq.s32.totalorder %s19, 1
      %p42 = por %p40, %p41
      %p44 = scmp.ne.s32.totalorder %s27, %s43
      %p45 = scmp.eq.s32.totalorder %s19, 0
      %p46 = por %p44, %p45
      %s47 = ssub.s32 %s13, %s20
      %p48 = scmp.eq.s32.totalorder %s47, 0
      %s50 = sadd.s32 %s49, 1
      %s51 = scalar_select %p48, %s49, %s50
      %p54 = pneg %p48
      %p55 = scmp.eq.s32.totalorder %s13, 1
      %p56 = por %p54, %p55
      %p57 = scmp.ne.s32.totalorder %s49, %s52
      %p58 = scmp.eq.s32.totalorder %s13, 0
      %p59 = por %p57, %p58
      %p60 = scmp.ne.s32.totalorder %s49, %s52
      %p61 = scmp.eq.s32.totalorder %s18, 1
      %p62 = por %p60, %p61
      %p63 = scmp.ne.s32.totalorder %s52, %s53
      %p64 = scmp.eq.s32.totalorder %s18, 0
      %p65 = por %p63, %p64
      %p66 = scmp.ne.s32.totalorder %s52, %s53
      %p67 = scmp.eq.s32.totalorder %s19, 1
      %p68 = por %p66, %p67
      %p70 = scmp.ne.s32.totalorder %s53, %s69
      %p71 = scmp.eq.s32.totalorder %s19, 0
      %p72 = por %p70, %p71
      %p73 = scmp.le.s32.totalorder 1, %s13
      %p74 = scmp.lt.s32.totalorder %s13, 3
      %p75 = pnand %p73, %p74
      %p76 = pneg %p75
      // Predicated region
      $region9: #{tpu_custom_call.1} parent=5 // pred_check
        _
      $region10: #{tpu_custom_call.1} parent=5 // pred_check_branch
        %78 = sbr.rel (%p75) target = $region12
      $region11: #{tpu_custom_call.1} parent=5 // pred_region
        %s79 = ssub.s32 %s13, 1
      $region12: #{tpu_custom_call.1} parent=5 // pred_fallthru
        _
      %p80 = scmp.lt.s32.totalorder %s13, 2
      // Predicated region
      $region13: #{tpu_custom_call.1} parent=5 // pred_check
        %p81 = pneg %p80
      $region14: #{tpu_custom_call.1} parent=5 // pred_check_branch
        %83 = sbr.rel (%p81) target = $region16
      $region15: #{tpu_custom_call.1} parent=5 // pred_region
        // Predicated region
        $region17: #{tpu_custom_call.1} parent=15 // pred_check
          %p84 = pneg %p33
        $region18: #{tpu_custom_call.1} parent=15 // pred_check_branch
          %86 = sbr.rel (%p84) target = $region20
        $region19: #{tpu_custom_call.1} parent=15 // pred_region
          %s87 = sand.u32 %s23, 1
          %s88 = scalar_lea.sflag [#allocation3], %s87
          %s89 = sand.u32 %s23, 1
          %s90 = smul.addr %s89, 8
          %s91 = scalar_lea.vmem [#allocation2], %s90
          %93 = vsyncadd %s88, 0
          %s94 = smul.addr %s13, 8
          %s95 = scalar_lea.hbm %s0, %s94
          %s97 = sshll.u32 %s95, 4
          %s98 = int_to_ptr.hbm [resolvable:$true] %s97
          %s99 = sshll.u32 %s91, 4
          %s100 = int_to_ptr.vmem [resolvable:$true] %s99
          %102 = dma.hbm_to_vmem [thread:$0]  %s98, 128, %s100, %s88
        $region20: #{tpu_custom_call.1} parent=15 // pred_fallthru
          _
      $region16: #{tpu_custom_call.1} parent=5 // pred_fallthru
        _
      %p103 = scmp.le.s32.totalorder 1, %s13
      %p104 = scmp.lt.s32.totalorder %s13, 3
      %p105 = pnand %p103, %p104
      %p106 = pneg %p105
      // Predicated region
      $region21: #{tpu_custom_call.1} parent=5 // pred_check
        _
      $region22: #{tpu_custom_call.1} parent=5 // pred_check_branch
        %108 = sbr.rel (%p105) target = $region24
      $region23: #{tpu_custom_call.1} parent=5 // pred_region
        %s109 = ssub.s32 %s13, 1
        %s110 = sand.u32 %s26, 1
        %s111 = scalar_lea.sflag [#allocation3], %s110
        %s112 = sand.u32 %s26, 1
        %s113 = smul.addr %s112, 8
        %s114 = scalar_lea.vmem [#allocation2], %s113
        // Predicated region
        $region25: #{tpu_custom_call.1} parent=23 // pred_check
          %p115 = pneg %p39
        $region26: #{tpu_custom_call.1} parent=23 // pred_check_branch
          %117 = sbr.rel (%p115) target = $region28
        $region27: #{tpu_custom_call.1} parent=23 // pred_region
          %119 = dma.done %s111, 128
        $region28: #{tpu_custom_call.1} parent=23 // pred_fallthru
          _
        %s120 = sand.u32 %s26, 1
        %s121 = scalar_lea.sflag [#allocation3], %s120
        %s122 = sand.u32 %s26, 1
        %s123 = smul.addr %s122, 8
        %s124 = scalar_lea.vmem [#allocation2], %s123
        %p125 = pneg %p39
        %p126 = pneg %p36
        %p127 = pneg %p65
        %p128 = pneg %p62
        %s129 = sand.u32 %s52, 1
        %s130 = scalar_lea.sflag [#allocation4], %s129
        %s131 = sand.u32 %s52, 1
        %s132 = smul.addr %s131, 8
        %s133 = scalar_lea.vmem [#allocation5], %s132
        %v134 = vld [vmem:[%s114] sm:$0xff]
        %v135 = vmin.f32 %v134, 20.0
        %v136 = vmul.f32 %v135, 1.442695
        %v137 = vpow.pop %v136
        %v138 = vadd.f32 %v137, 2.0
        %v139 = vmul.f32 %v137, %v138
        %v140 = vadd.f32 %v139, 2.0
        %v141 = vrcp.pop %v140
        %v142 = vmul.f32 %v140, %v141
        %v143 = vsub.f32 1.0, %v142
        %v144 = vmul.f32 %v141, %v143
        %v145 = vadd.f32 %v141, %v144
        %vm146 = vweird.f32 %v140
        %vm147 = vweird.f32 %v141
        %vm148 = vmor %vm146, %vm147
        %v149 = vsel %vm148, %v141, %v145
        %v150 = vand.u32 2147483647, %v140
        %vm151 = vcmp.eq.f32.partialorder %v150, 8.507059e+37
        %v152 = vand.u32 %v140, 2147483648
        %v153 = vor.u32 1.1754944e-38, %v152
        %v154 = vsel %vm151, %v153, %v149
        %v155 = vmul.f32 %v139, %v154
        %v156 = vmul.f32 %v134, %v155
        %157 = vst [vmem:[%s133] sm:$0xff] %v156
        %s158 = sand.u32 %s52, 1
        %s159 = scalar_lea.sflag [#allocation4], %s158
        %s160 = sand.u32 %s52, 1
        %s161 = smul.addr %s160, 8
        %s162 = scalar_lea.vmem [#allocation5], %s161
        // Predicated region
        $region29: #{tpu_custom_call.1} parent=23 // pred_check
          %p163 = pneg %p62
        $region30: #{tpu_custom_call.1} parent=23 // pred_check_branch
          %165 = sbr.rel (%p163) target = $region32
        $region31: #{tpu_custom_call.1} parent=23 // pred_region
          %167 = vsyncadd %s159, 0
          %s168 = smul.addr %s18, 8
          %s169 = scalar_lea.hbm %s1, %s168
          %s171 = sshll.u32 %s162, 4
          %s172 = int_to_ptr.vmem [resolvable:$true] %s171
          %s173 = sshll.u32 %s169, 4
          %s174 = int_to_ptr.hbm [resolvable:$true] %s173
          %176 = dma.vmem_to_hbm [thread:$0]  %s172, 128, %s174, %s159
        $region32: #{tpu_custom_call.1} parent=23 // pred_fallthru
          _
      $region24: #{tpu_custom_call.1} parent=5 // pred_fallthru
        _
      %p177 = scmp.le.s32.totalorder 2, %s13
      // Predicated region
      $region33: #{tpu_custom_call.1} parent=5 // pred_check
        %p178 = pneg %p177
      $region34: #{tpu_custom_call.1} parent=5 // pred_check_branch
        %180 = sbr.rel (%p178) target = $region36
      $region35: #{tpu_custom_call.1} parent=5 // pred_region
        %s181 = ssub.s32 %s13, 2
        // Predicated region
        $region37: #{tpu_custom_call.1} parent=35 // pred_check
          %p182 = pneg %p68
        $region38: #{tpu_custom_call.1} parent=35 // pred_check_branch
          %184 = sbr.rel (%p182) target = $region40
        $region39: #{tpu_custom_call.1} parent=35 // pred_region
          %s185 = sand.u32 %s53, 1
          %s186 = scalar_lea.sflag [#allocation4], %s185
          %s187 = sand.u32 %s53, 1
          %s188 = smul.addr %s187, 8
          %s189 = scalar_lea.vmem [#allocation5], %s188
          %191 = dma.done %s186, 128
        $region40: #{tpu_custom_call.1} parent=35 // pred_fallthru
          _
      $region36: #{tpu_custom_call.1} parent=5 // pred_fallthru
        _
    $region6: #{tpu_custom_call.1} parent=1 // loop_footer
      %s17 = sadd.s32 1, %s13
    $region7: #{tpu_custom_call.1} parent=1 // loop_footer_branch
      %12 = sbr.rel target = $region3
    $region8: #{tpu_custom_call.1} parent=1 // loop_exit
      _
    %192 = vsyncpa [#allocation3], 1
    %s193 = scalar_lea.sflag [#allocation3], 1
    %194 = vsyncpa %s193, 1
    %195 = vsyncpa [#allocation4], 1
    %s196 = scalar_lea.sflag [#allocation4], 1
    %197 = vsyncpa %s196, 1

</llo_original>
